<compile_context>
chip_gen: v7x
topology: tpu7x:2x2x1
jax: 0.10.0
libtpu: 0.0.40
codegen_flags: <defaults>
</compile_context>

<pallas_src>
import math
import functools

import jax
import jax.numpy as jnp
from jax import lax
from jax.experimental import pallas as pl
from jax.experimental.pallas import tpu as pltpu


# Explicit scoped-VMEM budget (defaults are 16 MiB on v5e, 32 MiB on v6e/v7x).
# 48 MiB stays below physical VMEM on every chip (64 MiB v7x, 128 MiB v5e/v6e).
_VMEM_LIMIT_BYTES = 48 * 1024 * 1024


# ---------------------------------------------------------------------------
# Row-tiled dense layer:  y = x @ Wt + b   (Wt pre-transposed (d_in, d_out), bf16)
# ---------------------------------------------------------------------------
def _linear_kernel(x_ref, wt_ref, b_ref, o_ref):
    x = x_ref[...].astype(wt_ref.dtype)                       # bf16 MXU operands
    acc = jnp.dot(x, wt_ref[...], preferred_element_type=jnp.float32)
    o_ref[...] = (acc + b_ref[...].astype(jnp.float32)).astype(o_ref.dtype)


def linear(x, wt, b, *, tm=512, out_dtype=None):
    """x: (N, d_in) f32/bf16; wt: (d_in, d_out) bf16 pre-transposed; b: (d_out,) f32."""
    n, d_in = x.shape
    d_out = wt.shape[1]
    out_dtype = x.dtype if out_dtype is None else out_dtype
    tm = n if n <= tm else tm                                  # 512 is a multiple of 8
    grid = (pl.cdiv(n, tm),)
    cost = pl.CostEstimate(
        flops=2 * n * d_in * d_out,
        transcendentals=0,
        bytes_accessed=int(x.dtype.itemsize * n * d_in + 2 * d_in * d_out + 4 * d_out
                           + jnp.dtype(out_dtype).itemsize * n * d_out),
    )
    return pl.pallas_call(
        _linear_kernel,
        out_shape=jax.ShapeDtypeStruct((n, d_out), out_dtype),
        grid=grid,
        in_specs=[
            pl.BlockSpec((tm, d_in), lambda i: (i, 0)),
            pl.BlockSpec((d_in, d_out), lambda i: (0, 0)),     # resident weight
            pl.BlockSpec((1, d_out), lambda i: (0, 0)),        # resident bias
        ],
        out_specs=pl.BlockSpec((tm, d_out), lambda i: (i, 0)),
        compiler_params=pltpu.CompilerParams(
            dimension_semantics=("parallel",),
            vmem_limit_bytes=_VMEM_LIMIT_BYTES),
        cost_estimate=cost,
    )(x, wt, b.reshape(1, d_out))


# ---------------------------------------------------------------------------
# Fused Q/K/V projection (self-attention path): one matmul, three outputs.
# ---------------------------------------------------------------------------
def _qkv_kernel(x_ref, wt_ref, b_ref, q_ref, k_ref, v_ref):
    d_model = q_ref.shape[-1]
    x = x_ref[...].astype(wt_ref.dtype)                        # bf16 MXU operands
    acc = jnp.dot(x, wt_ref[...], preferred_element_type=jnp.float32)
    acc = acc + b_ref[...].astype(jnp.float32)
    q_ref[...] = acc[:, :d_model].astype(q_ref.dtype)
    k_ref[...] = acc[:, d_model:2 * d_model].astype(k_ref.dtype)
    v_ref[...] = acc[:, 2 * d_model:].astype(v_ref.dtype)


def fused_qkv_projection(x, wqkv_t, bqkv, *, tm=512, out_dtype=jnp.bfloat16):
    """x: (N, d_model); wqkv_t: (d_model, 3*d_model) bf16; bqkv: (3*d_model,) f32."""
    n, d_in = x.shape
    d3 = wqkv_t.shape[1]
    d_model = d3 // 3
    tm = n if n <= tm else tm
    grid = (pl.cdiv(n, tm),)
    cost = pl.CostEstimate(
        flops=2 * n * d_in * d3,
        transcendentals=0,
        bytes_accessed=int(x.dtype.itemsize * n * d_in + 2 * d_in * d3 + 4 * d3
                           + jnp.dtype(out_dtype).itemsize * n * d3),
    )
    out_sds = jax.ShapeDtypeStruct((n, d_model), out_dtype)
    out_spec = pl.BlockSpec((tm, d_model), lambda i: (i, 0))
    return pl.pallas_call(
        _qkv_kernel,
        out_shape=(out_sds, out_sds, out_sds),
        grid=grid,
        in_specs=[
            pl.BlockSpec((tm, d_in), lambda i: (i, 0)),
            pl.BlockSpec((d_in, d3), lambda i: (0, 0)),        # resident fused weight
            pl.BlockSpec((1, d3), lambda i: (0, 0)),           # resident fused bias
        ],
        out_specs=(out_spec, out_spec, out_spec),
        compiler_params=pltpu.CompilerParams(
            dimension_semantics=("parallel",),
            vmem_limit_bytes=_VMEM_LIMIT_BYTES),
        cost_estimate=cost,
    )(x, wqkv_t, bqkv.reshape(1, d3))


# ---------------------------------------------------------------------------
# Flash-style attention with the output projection fused into the epilogue.
# Grid = (batch, q-tiles, kv-tiles["arbitrary"]).  Per step, all heads are
# processed from one full-block load; per-KV-step accumulator and the final
# projected output are stored as single lane-dense (tq, d_model) blocks.
# ---------------------------------------------------------------------------
def _attn_out_kernel(q_ref, k_ref, v_ref, wo_ref, bo_ref, o_ref,
                     m_sc, l_sc, acc_sc, *, h, d_k):
    kv_i = pl.program_id(2)

    @pl.when(kv_i == 0)
    def _init():
        m_sc[...] = jnp.full_like(m_sc, -jnp.inf)
        l_sc[...] = jnp.zeros_like(l_sc)
        acc_sc[...] = jnp.zeros_like(acc_sc)

    # One load per block; per-head slices come out of registers (1/sqrt(d_k) is
    # already folded into the Q projection, so no scale multiply here).
    q_all = q_ref[...]                                 # (tq,  d_model) bf16
    k_all = k_ref[...]                                 # (tkv, d_model) bf16
    v_all = v_ref[...]                                 # (tkv, d_model) bf16
    acc_all = acc_sc[...]                              # (tq,  d_model) f32

    new_acc = []
    for head in range(h):
        lo = head * d_k
        q = q_all[:, lo:lo + d_k]
        k = k_all[:, lo:lo + d_k]
        v = v_all[:, lo:lo + d_k]
        # QK^T without an explicit transpose: contract last dims.
        s = lax.dot_general(q, k, (((1,), (1,)), ((), ())),
                            preferred_element_type=jnp.float32)        # (tq, tkv)
        m_prev = m_sc[head]                                            # (tq, 1)
        m_new = jnp.maximum(m_prev, jnp.max(s, axis=-1, keepdims=True))
        alpha = jnp.exp(m_prev - m_new)
        p = jnp.exp(s - m_new)
        l_sc[head] = alpha * l_sc[head] + jnp.sum(p, axis=-1, keepdims=True)
        m_sc[head] = m_new
        pv = jnp.dot(p.astype(v.dtype), v, preferred_element_type=jnp.float32)
        new_acc.append(alpha * acc_all[:, lo:lo + d_k] + pv)
    # Single lane-dense accumulator store per KV step.
    acc_sc[...] = jnp.concatenate(new_acc, axis=-1)

    @pl.when(kv_i == pl.num_programs(2) - 1)
    def _finalize():
        acc = acc_sc[...]
        parts = []
        for head in range(h):
            # Softmax normalization deferred to the epilogue; approx reciprocal
            # runs on the EUP (documented deviation from exact division).
            inv = pl.reciprocal(l_sc[head], approx=True)               # (tq, 1)
            parts.append(acc[:, head * d_k:(head + 1) * d_k] * inv)
        ctx = jnp.concatenate(parts, axis=-1).astype(wo_ref.dtype)     # (tq, d_model)
        out = jnp.dot(ctx, wo_ref[...], preferred_element_type=jnp.float32)
        o_ref[...] = (out + bo_ref[...].astype(jnp.float32)).astype(o_ref.dtype)


def attention_output(q, k, v, wo_t, bo, *, h, tq=256, tkv=512,
                     out_dtype=jnp.float32):
    """q, k, v: (B, S, d_model) (heads packed in feature dim, Q pre-scaled).
    Returns softmax(QK^T)V projected by wo_t/bo: (B, S, d_model)."""
    b, s_len, d_model = q.shape
    assert d_model % h == 0
    d_k = d_model // h
    # Tiles must divide S; otherwise fall back to full residency so padded KV
    # columns never pollute the softmax.
    # TODO(synk): masked tails for very long, non-divisible S.
    tq = tq if (s_len > tq and s_len % tq == 0) else s_len
    tkv = tkv if (s_len > tkv and s_len % tkv == 0) else s_len
    grid = (b, s_len // tq, s_len // tkv)

    cost = pl.CostEstimate(
        flops=4 * b * h * s_len * s_len * d_k + 2 * b * s_len * d_model * d_model,
        transcendentals=b * h * s_len * s_len,
        bytes_accessed=int(q.dtype.itemsize * 3 * b * s_len * d_model
                           + 2 * d_model * d_model
                           + jnp.dtype(out_dtype).itemsize * b * s_len * d_model),
    )

    q_spec = pl.BlockSpec((None, tq, d_model), lambda bi, qi, ki: (bi, qi, 0))
    kv_spec = pl.BlockSpec((None, tkv, d_model), lambda bi, qi, ki: (bi, ki, 0))
    o_spec = pl.BlockSpec((None, tq, d_model), lambda bi, qi, ki: (bi, qi, 0))
    w_spec = pl.BlockSpec((d_model, d_model), lambda bi, qi, ki: (0, 0))
    b_spec = pl.BlockSpec((1, d_model), lambda bi, qi, ki: (0, 0))

    kernel = functools.partial(_attn_out_kernel, h=h, d_k=d_k)
    return pl.pallas_call(
        kernel,
        out_shape=jax.ShapeDtypeStruct((b, s_len, d_model), out_dtype),
        grid=grid,
        in_specs=[q_spec, kv_spec, kv_spec, w_spec, b_spec],
        out_specs=o_spec,
        scratch_shapes=[
            pltpu.VMEM((h, tq, 1), jnp.float32),    # running max per head
            pltpu.VMEM((h, tq, 1), jnp.float32),    # running denom per head
            pltpu.VMEM((tq, d_model), jnp.float32), # merged-head accumulator
        ],
        compiler_params=pltpu.CompilerParams(
            dimension_semantics=("parallel", "parallel", "arbitrary"),
            vmem_limit_bytes=_VMEM_LIMIT_BYTES),
        cost_estimate=cost,
    )(q, k, v, wo_t, bo.reshape(1, d_model))


# ---------------------------------------------------------------------------
# MultiHeadAttention forward
# ---------------------------------------------------------------------------
def multi_head_attention(params, query, key, value):
    """query/key/value: (B, S, d_model) f32 -> (B, S, d_model) f32."""
    b, s_len, d_model = query.shape
    h = params["h"]

    if query is key and key is value:
        # BERT self-attention: one fused QKV matmul over one activation read.
        q2, k2, v2 = fused_qkv_projection(
            query.reshape(b * s_len, d_model), params["qkv_wt"], params["qkv_b"])
    else:
        q2 = linear(query.reshape(b * s_len, d_model), params["q_wt"],
                    params["q_b"], out_dtype=jnp.bfloat16)
        k2 = linear(key.reshape(b * s_len, d_model), params["k_wt"],
                    params["k_b"], out_dtype=jnp.bfloat16)
        v2 = linear(value.reshape(b * s_len, d_model), params["v_wt"],
                    params["v_b"], out_dtype=jnp.bfloat16)

    # Heads stay packed in the feature dim; output projection fused in-kernel.
    return attention_output(q2.reshape(b, s_len, d_model),
                            k2.reshape(b, s_len, d_model),
                            v2.reshape(b, s_len, d_model),
                            params["o_wt"], params["o_b"], h=h,
                            out_dtype=query.dtype)


# ---------------------------------------------------------------------------
# Parameter init: f32 "torch-equivalent" reference weights + kernel-ready
# (pre-transposed, bf16, 1/sqrt(d_k) folded into Q weight & bias) weights.
# ---------------------------------------------------------------------------
def init_params(key, h, d_model):
    assert d_model % h == 0
    ks = jax.random.split(key, 8)
    bound = 1.0 / math.sqrt(d_model)

    def u(k, shape):
        return jax.random.uniform(k, shape, jnp.float32, -bound, bound)

    # torch nn.Linear layout is (d_out, d_in); transpose ONCE here.
    q_wt = u(ks[0], (d_model, d_model)).T
    k_wt = u(ks[2], (d_model, d_model)).T
    v_wt = u(ks[4], (d_model, d_model)).T
    o_wt = u(ks[6], (d_model, d_model)).T
    q_b, k_b, v_b, o_b = (u(ks[1], (d_model,)), u(ks[3], (d_model,)),
                          u(ks[5], (d_model,)), u(ks[7], (d_model,)))

    ref = {"q_wt": q_wt, "q_b": q_b, "k_wt": k_wt, "k_b": k_b,
           "v_wt": v_wt, "v_b": v_b, "o_wt": o_wt, "o_b": o_b}

    d_k = d_model // h
    scale = 1.0 / math.sqrt(d_k)
    q_wt_s = (q_wt * scale).astype(jnp.bfloat16)   # fold 1/sqrt(d_k) into weight
    q_b_s = q_b * scale                            # ...and into the bias
    k_wt_b = k_wt.astype(jnp.bfloat16)
    v_wt_b = v_wt.astype(jnp.bfloat16)

    kern = {
        "h": h,
        "q_wt": q_wt_s, "q_b": q_b_s,
        "k_wt": k_wt_b, "k_b": k_b,
        "v_wt": v_wt_b, "v_b": v_b,
        "o_wt": o_wt.astype(jnp.bfloat16), "o_b": o_b,
        # fused QKV weight/bias built once at init.
        "qkv_wt": jnp.concatenate([q_wt_s, k_wt_b, v_wt_b], axis=1),
        "qkv_b": jnp.concatenate([q_b_s, k_b, v_b], axis=0),
    }
    return kern, ref


def _reference(ref, h, query, key, value):
    # pure-JAX f32 reference (matches the PyTorch module in eval mode, mask=None)
    b, s_len, d_model = query.shape
    d_k = d_model // h

    def lin(x, wt, bb):
        return x @ wt + bb

    def split(x):
        return x.reshape(b, s_len, h, d_k).transpose(0, 2, 1, 3)

    q = split(lin(query, ref["q_wt"], ref["q_b"]))
    k = split(lin(key, ref["k_wt"], ref["k_b"]))
    v = split(lin(value, ref["v_wt"], ref["v_b"]))
    scores = jnp.einsum("bhqd,bhkd->bhqk", q, k) / math.sqrt(d_k)
    p = jax.nn.softmax(scores, axis=-1)
    x = jnp.einsum("bhqk,bhkd->bhqd", p, v)
    x = x.transpose(0, 2, 1, 3).reshape(b, s_len, d_model)
    return lin(x, ref["o_wt"], ref["o_b"])


if __name__ == "__main__":
    B, S, H, D_MODEL = 2, 8, 4, 32

    root = jax.random.PRNGKey(0)
    kp, kq, kk, kv = jax.random.split(root, 4)
    params, ref_params = init_params(kp, H, D_MODEL)

    x_self = jax.random.normal(kq, (B, S, D_MODEL), jnp.float32)
    key_in = jax.random.normal(kk, (B, S, D_MODEL), jnp.float32)
    value_in = jax.random.normal(kv, (B, S, D_MODEL), jnp.float32)

    # Self-attention path (fused QKV projection + fused output projection).
    out_self = jax.block_until_ready(multi_head_attention(params, x_self, x_self, x_self))
    ref_self = _reference(ref_params, H, x_self, x_self, x_self)
    assert out_self.shape == (B, S, D_MODEL)
    # bf16 MXU operands -> compare at bf16-appropriate tolerance vs f32 reference.
    assert jnp.allclose(out_self, ref_self, atol=2e-2, rtol=2e-2), "self-attn mismatch"

    # Cross-attention path (separate projections).
    out_cross = jax.block_until_ready(multi_head_attention(params, x_self, key_in, value_in))
    ref_cross = _reference(ref_params, H, x_self, key_in, value_in)
    assert jnp.allclose(out_cross, ref_cross, atol=2e-2, rtol=2e-2), "cross-attn mismatch"

    print("KERNEL_OK")
</pallas_src>

<mosaic_0001>
module attributes {stable_mosaic.version = 11 : i64} {
  func.func @_qkv_kernel(%arg0: i32, %arg1: memref<16x32xf32, #tpu.memory_space<vmem>>, %arg2: memref<32x96xbf16, #tpu.memory_space<vmem>>, %arg3: memref<1x96xf32, #tpu.memory_space<vmem>>, %arg4: memref<16x32xbf16, #tpu.memory_space<vmem>>, %arg5: memref<16x32xbf16, #tpu.memory_space<vmem>>, %arg6: memref<16x32xbf16, #tpu.memory_space<vmem>>) attributes {dimension_semantics = [#tpu.dimension_semantics<parallel>], iteration_bounds = array<i64: 1>, scalar_prefetch = 0 : i64, scratch_operands = 0 : i64, tpu.core_type = #tpu.core_type<tc>, window_params = [{transform_indices = @transform_0, window_bounds = array<i64: 16, 32>}, {pipeline_mode = #tpu.pipeline_mode<synchronous>, transform_indices = @transform_1, window_bounds = array<i64: 32, 96>}, {pipeline_mode = #tpu.pipeline_mode<synchronous>, transform_indices = @transform_2, window_bounds = array<i64: 1, 96>}, {transform_indices = @transform_3, window_bounds = array<i64: 16, 32>}, {transform_indices = @transform_4, window_bounds = array<i64: 16, 32>}, {transform_indices = @transform_5, window_bounds = array<i64: 16, 32>}]} {
    %c0 = arith.constant 0 : index
    %c0_0 = arith.constant 0 : index
    %0 = vector.load %arg1[%c0, %c0_0] : memref<16x32xf32, #tpu.memory_space<vmem>>, vector<16x32xf32>
    %1 = arith.truncf %0 : vector<16x32xf32> to vector<16x32xbf16>
    %c0_1 = arith.constant 0 : index
    %c0_2 = arith.constant 0 : index
    %2 = vector.load %arg2[%c0_1, %c0_2] : memref<32x96xbf16, #tpu.memory_space<vmem>>, vector<32x96xbf16>
    %cst = arith.constant dense<0.000000e+00> : vector<16x96xf32>
    %3 = tpu.matmul %1, %2, %cst {dimension_numbers = #tpu.dot_dimension_numbers<[1], [0], [0], [1], [0, 0, 1, 1], [], []>} : vector<16x32xbf16>, vector<32x96xbf16>, vector<16x96xf32> -> vector<16x96xf32>
    %c0_3 = arith.constant 0 : index
    %c0_4 = arith.constant 0 : index
    %4 = vector.load %arg3[%c0_3, %c0_4] : memref<1x96xf32, #tpu.memory_space<vmem>>, vector<1x96xf32>
    %5 = vector.broadcast %4 : vector<1x96xf32> to vector<16x96xf32>
    %6 = arith.addf %3, %5 : vector<16x96xf32>
    %7 = vector.extract_strided_slice %6 {offsets = [0, 0], sizes = [16, 32], strides = [1, 1]} : vector<16x96xf32> to vector<16x32xf32>
    %8 = arith.truncf %7 : vector<16x32xf32> to vector<16x32xbf16>
    %c0_5 = arith.constant 0 : index
    %c0_6 = arith.constant 0 : index
    %9 = vector.load %arg4[%c0_5, %c0_6] : memref<16x32xbf16, #tpu.memory_space<vmem>>, vector<16x32xbf16>
    tpu.vector_store %arg4[%c0_5, %c0_6], %8 {strides = array<i32>} : memref<16x32xbf16, #tpu.memory_space<vmem>>, vector<16x32xbf16>,
    %10 = vector.extract_strided_slice %6 {offsets = [0, 32], sizes = [16, 32], strides = [1, 1]} : vector<16x96xf32> to vector<16x32xf32>
    %11 = arith.truncf %10 : vector<16x32xf32> to vector<16x32xbf16>
    %c0_7 = arith.constant 0 : index
    %c0_8 = arith.constant 0 : index
    %12 = vector.load %arg5[%c0_7, %c0_8] : memref<16x32xbf16, #tpu.memory_space<vmem>>, vector<16x32xbf16>
    tpu.vector_store %arg5[%c0_7, %c0_8], %11 {strides = array<i32>} : memref<16x32xbf16, #tpu.memory_space<vmem>>, vector<16x32xbf16>,
    %13 = vector.extract_strided_slice %6 {offsets = [0, 64], sizes = [16, 32], strides = [1, 1]} : vector<16x96xf32> to vector<16x32xf32>
    %14 = arith.truncf %13 : vector<16x32xf32> to vector<16x32xbf16>
    %c0_9 = arith.constant 0 : index
    %c0_10 = arith.constant 0 : index
    %15 = vector.load %arg6[%c0_9, %c0_10] : memref<16x32xbf16, #tpu.memory_space<vmem>>, vector<16x32xbf16>
    tpu.vector_store %arg6[%c0_9, %c0_10], %14 {strides = array<i32>} : memref<16x32xbf16, #tpu.memory_space<vmem>>, vector<16x32xbf16>,
    return
  }
  func.func @transform_0(%arg0: i32) -> (i32, i32) {
    %c0_i32 = arith.constant 0 : i32
    %c0_i32_0 = arith.constant 0 : i32
    return %arg0, %c0_i32 : i32, i32
  }
  func.func @transform_1(%arg0: i32) -> (i32, i32) {
    %c0_i32 = arith.constant 0 : i32
    %c0_i32_0 = arith.constant 0 : i32
    %c0_i32_1 = arith.constant 0 : i32
    return %c0_i32, %c0_i32_0 : i32, i32
  }
  func.func @transform_2(%arg0: i32) -> (i32, i32) {
    %c0_i32 = arith.constant 0 : i32
    %c0_i32_0 = arith.constant 0 : i32
    %c0_i32_1 = arith.constant 0 : i32
    return %c0_i32, %c0_i32_0 : i32, i32
  }
  func.func @transform_3(%arg0: i32) -> (i32, i32) {
    %c0_i32 = arith.constant 0 : i32
    %c0_i32_0 = arith.constant 0 : i32
    return %arg0, %c0_i32 : i32, i32
  }
  func.func @transform_4(%arg0: i32) -> (i32, i32) {
    %c0_i32 = arith.constant 0 : i32
    %c0_i32_0 = arith.constant 0 : i32
    return %arg0, %c0_i32 : i32, i32
  }
  func.func @transform_5(%arg0: i32) -> (i32, i32) {
    %c0_i32 = arith.constant 0 : i32
    %c0_i32_0 = arith.constant 0 : i32
    return %arg0, %c0_i32 : i32, i32
  }
}

</mosaic_0001>

<llo_original>
// kernel: tpu_custom_call.1
$region0: #{tpu_custom_call.1}
  #allocation0 [shape = 'u32[]', space=smem, size = 0x4, offset = 0x4, fixed_abs, tag = 'smem constant byte address 0x4 - core index']
  #allocation1 [shape = 'u32[144,128]{1,0:T(1,128)}', space=vmem, size = 0x12000, scoped, tag = 'internal scratch']
  %s0 = inlined_call_operand.hbm [shape: f32[16,32], index: 0, kind: input, shape index: {}]
  %s1 = inlined_call_operand.hbm [shape: bf16[32,96], index: 1, kind: input, shape index: {}]
  %s2 = inlined_call_operand.vmem [shape: f32[1,96], index: 2, kind: input, shape index: {}]
  %s3 = inlined_call_operand.hbm [shape: bf16[16,32], index: 3, kind: output, shape index: {0}]
  %s4 = inlined_call_operand.hbm [shape: bf16[16,32], index: 4, kind: output, shape index: {1}]
  %s5 = inlined_call_operand.hbm [shape: bf16[16,32], index: 5, kind: output, shape index: {2}]
  %6 = xla_tuple %s3, %s4, %s5
  %s7 = sld [smem:[#allocation0]]
  $region46: #{tpu_custom_call.1} parent=0
    _
  %s9 = ssub.s32 1, %s7
  %s10 = scalar_select 0, %s9, %s7
  $region1: #{tpu_custom_call.1} parent=0
    #allocation2 [shape = 'u8[8192]{0}', space=vmem, size = 0x2000, scoped, tag = 'input window, operand 0, single buffered']
    #allocation3 [shape = 's32[1]{0}', space=sflag, size = 0x4, scoped, tag = 'scoped memory for tpu_custom_call.1']
    #allocation4 [shape = 's32[1]{0}', space=sflag, size = 0x4, scoped, tag = 'scoped memory for tpu_custom_call.1']
    #allocation5 [shape = 'u8[8192]{0}', space=vmem, size = 0x2000, scoped, tag = 'input window, operand 1, single buffered']
    #allocation6 [shape = 's32[1]{0}', space=sflag, size = 0x4, scoped, tag = 'scoped memory for tpu_custom_call.1']
    #allocation7 [shape = 'u8[4096]{0}', space=vmem, size = 0x1000, scoped, tag = 'output window, operand 0, single buffered']
    #allocation8 [shape = 'u8[4096]{0}', space=vmem, size = 0x1000, scoped, tag = 'output window, operand 1, single buffered']
    #allocation9 [shape = 's32[1]{0}', space=sflag, size = 0x4, scoped, tag = 'scoped memory for tpu_custom_call.1']
    #allocation10 [shape = 'u8[4096]{0}', space=vmem, size = 0x1000, scoped, tag = 'output window, operand 2, single buffered']
    %11 = vsyncpa [#allocation3], 0
    %12 = vsyncpa [#allocation6], 0
    %13 = vsyncpa [#allocation4], 0
    %14 = vsyncpa [#allocation9], 0
    // Predicated region
    $region2: #{tpu_custom_call.1} parent=1 // pred_check
      _
    $region3: #{tpu_custom_call.1} parent=1 // pred_check_branch
      %16 = sbr.rel (0) target = $region5
    $region4: #{tpu_custom_call.1} parent=1 // pred_region
      %s18 = ssub.s32 256, 256
      %19 = vsyncadd [#allocation3], %s18
      %s20 = sshll.u32 [#allocation2], 4
      %s21 = int_to_ptr.vmem [resolvable:$true] %s20
      %26 = dma.hbm_to_vmem [thread:$0]  %s0, 256, %s21, [#allocation3], 128, 128, 8
    $region5: #{tpu_custom_call.1} parent=1 // pred_fallthru
      _
    // Predicated region
    $region6: #{tpu_custom_call.1} parent=1 // pred_check
      _
    $region7: #{tpu_custom_call.1} parent=1 // pred_check_branch
      %28 = sbr.rel (0) target = $region9
    $region8: #{tpu_custom_call.1} parent=1 // pred_region
      %s30 = ssub.s32 256, 256
      %31 = vsyncadd [#allocation6], %s30
      %s32 = sshll.u32 [#allocation5], 4
      %s33 = int_to_ptr.vmem [resolvable:$true] %s32
      %38 = dma.hbm_to_vmem [thread:$0]  %s1, 256, %s33, [#allocation6], 64, 64, 4
    $region9: #{tpu_custom_call.1} parent=1 // pred_fallthru
      _
    // Predicated region
    $region10: #{tpu_custom_call.1} parent=1 // pred_check
      _
    $region11: #{tpu_custom_call.1} parent=1 // pred_check_branch
      %40 = sbr.rel (0) target = $region13
    $region12: #{tpu_custom_call.1} parent=1 // pred_region
      _
    $region13: #{tpu_custom_call.1} parent=1 // pred_fallthru
      _
    // Predicated region
    $region14: #{tpu_custom_call.1} parent=1 // pred_check
      _
    $region15: #{tpu_custom_call.1} parent=1 // pred_check_branch
      %42 = sbr.rel (0) target = $region17
    $region16: #{tpu_custom_call.1} parent=1 // pred_region
      %43 = dma.done [#allocation3], 256
    $region17: #{tpu_custom_call.1} parent=1 // pred_fallthru
      _
    // Predicated region
    $region18: #{tpu_custom_call.1} parent=1 // pred_check
      _
    $region19: #{tpu_custom_call.1} parent=1 // pred_check_branch
      %45 = sbr.rel (0) target = $region21
    $region20: #{tpu_custom_call.1} parent=1 // pred_region
      %46 = dma.done [#allocation6], 256
    $region21: #{tpu_custom_call.1} parent=1 // pred_fallthru
      _
    %v48 = vld [vmem:[#allocation2] sm:$0xff]
    %v49 = vld [vmem:[#allocation2 + $0x8] sm:$0xff]
    %v50 = vpack.c.bf16 %v49, %v48
    %v51 = vld [vmem:[#allocation5] sm:$0xf]
    %v52 = vld [vmem:[#allocation5 + $0x4] sm:$0xf]
    %v53 = vld [vmem:[#allocation5 + $0x8] sm:$0xf]
    %v54 = vld [vmem:[#allocation5 + $0xc] sm:$0xf]
    %v55 = vld [vmem:[%s2] sm:$0x1]
    %v57 = vlaneseq
    %v58 = vshrl.u32 %v57, 7
    %v59 = vsub.s32 0, %v58
    %v60 = vrot.slane %v55, %v59
    %v66 = vunpack.c.l.b16 %v51
    %v67 = vunpack.c.l.b16 %v52
    %v68 = vunpack.c.l.b16 %v53
    %v69 = vunpack.c.l.b16 %v54
    %v70 = vpack.c.b16 %v67, %v66
    %v71 = vpack.c.b16 %v69, %v68
    %vm74 = vcmask 261120
    %v76 = vsel %vm74, %v50, 0
    %78 = vmatprep.subr.bf16.mxu0 0
    %79 = vmatpush1.bf16.msra.mxu0 %v70
    %80 = vmatprep.subr.bf16.mxu0 0
    %81 = vmatpush1.bf16.msra.mxu0 %v71
    %82 = vmatprep.subr.bf16.mxu0 0
    %83 = vmatpush1.bf16.msra.mxu0 0
    %84 = vmatprep.subr.bf16.mxu0 0
    %85 = vmatpush1.bf16.msra.mxu0 0
    %86 = vmatprep.subr.bf16.mxu0 0
    %87 = vmatpush1.bf16.msra.mxu0 0
    %88 = vmatprep.subr.bf16.mxu0 0
    %89 = vmatpush1.bf16.msra.mxu0 0
    %90 = vmatprep.subr.bf16.mxu0 0
    %91 = vmatpush1.bf16.msra.mxu0 0
    %92 = vmatprep.subr.bf16.mxu0 0
    %93 = vmatpush1.bf16.msra.mxu0 0
    %94 = vmatprep.subr.bf16.mxu0 0
    %95 = vmatpush1.bf16.msra.mxu0 0
    %96 = vmatprep.subr.bf16.mxu0 0
    %97 = vmatpush1.bf16.msra.mxu0 0
    %98 = vmatprep.subr.bf16.mxu0 0
    %99 = vmatpush1.bf16.msra.mxu0 0
    %100 = vmatprep.subr.bf16.mxu0 0
    %101 = vmatpush1.bf16.msra.mxu0 0
    %102 = vmatprep.subr.bf16.mxu0 0
    %103 = vmatpush1.bf16.msra.mxu0 0
    %104 = vmatprep.subr.bf16.mxu0 0
    %105 = vmatpush1.bf16.msra.mxu0 0
    %106 = vmatprep.subr.bf16.mxu0 0
    %107 = vmatpush1.bf16.msra.mxu0 0
    %108 = vmatprep.subr.bf16.mxu0 0
    %109 = vmatpush1.bf16.msra.mxu0 0
    %110 = vmatprep.mubr.bf16.mxu0 0
    %111 = vmatmul.mubr.bf16.gmra.mrb[0].mxu0 %v76
    %v112 = vpop.f32.mrb[0].mxu0
    %v113 = vadd.f32 %v60, %v112
    %v114 = vpop.f32.mrb[0].mxu0
    %v115 = vpop.f32.mrb[0].mxu0
    %v116 = vadd.f32 %v60, %v115
    %v117 = vpop.f32.mrb[0].mxu0
    %118 = vdwg.mxu0
    %v119 = vpack.c.bf16 %v116, %v113
    %v121 = vunpack.c.l.b16 %v119
    %v122 = vunpack.c.h.b16 %v119
    %v123 = vpack.c.b16 %v121, %v121
    %v124 = vpack.c.b16 %v122, %v122
    %vm127 = vcmask 257024
    %128 = vst.msk [vmem:[#allocation7] sm:$0xf] %vm127, %v123
    %129 = vst.msk [vmem:[#allocation7 + $0x4] sm:$0xf] %vm127, %v124
    %130 = vrot.lane.b32.xlu0 %v123, 96
    %v131 = vpop.permute.xlu0 %130
    %132 = vrot.lane.b32.xlu0 %v124, 96
    %v133 = vpop.permute.xlu0 %132
    %136 = vst.msk [vmem:[#allocation8] sm:$0xf] %vm127, %v131
    %137 = vst.msk [vmem:[#allocation8 + $0x4] sm:$0xf] %vm127, %v133
    %138 = vrot.lane.b32.xlu0 %v123, 64
    %v139 = vpop.permute.xlu0 %138
    %140 = vrot.lane.b32.xlu0 %v124, 64
    %v141 = vpop.permute.xlu0 %140
    %144 = vst.msk [vmem:[#allocation10] sm:$0xf] %vm127, %v139
    %145 = vst.msk [vmem:[#allocation10 + $0x4] sm:$0xf] %vm127, %v141
    // Predicated region
    $region22: #{tpu_custom_call.1} parent=1 // pred_check
      _
    $region23: #{tpu_custom_call.1} parent=1 // pred_check_branch
      %147 = sbr.rel (0) target = $region25
    $region24: #{tpu_custom_call.1} parent=1 // pred_region
      %s149 = ssub.s32 128, 128
      %150 = vsyncadd [#allocation4], %s149
      %s151 = sshll.u32 [#allocation7], 4
      %s152 = int_to_ptr.vmem [resolvable:$true] %s151
      %157 = dma.vmem_to_hbm [thread:$0]  %s152, 128, %s3, [#allocation4], 64, 64, 4
    $region25: #{tpu_custom_call.1} parent=1 // pred_fallthru
      _
    // Predicated region
    $region26: #{tpu_custom_call.1} parent=1 // pred_check
      _
    $region27: #{tpu_custom_call.1} parent=1 // pred_check_branch
      %159 = sbr.rel (0) target = $region29
    $region28: #{tpu_custom_call.1} parent=1 // pred_region
      %s161 = ssub.s32 128, 128
      %162 = vsyncadd [#allocation9], %s161
      %s163 = sshll.u32 [#allocation8], 4
      %s164 = int_to_ptr.vmem [resolvable:$true] %s163
      %169 = dma.vmem_to_hbm [thread:$0]  %s164, 128, %s4, [#allocation9], 64, 64, 4
    $region29: #{tpu_custom_call.1} parent=1 // pred_fallthru
      _
    // Predicated region
    $region30: #{tpu_custom_call.1} parent=1 // pred_check
      _
    $region31: #{tpu_custom_call.1} parent=1 // pred_check_branch
      %171 = sbr.rel (0) target = $region33
    $region32: #{tpu_custom_call.1} parent=1 // pred_region
      %s173 = ssub.s32 128, 128
      %174 = vsyncadd [#allocation9], %s173
      %s175 = sshll.u32 [#allocation10], 4
      %s176 = int_to_ptr.vmem [resolvable:$true] %s175
      %181 = dma.vmem_to_hbm [thread:$0]  %s176, 128, %s5, [#allocation9], 64, 64, 4
    $region33: #{tpu_custom_call.1} parent=1 // pred_fallthru
      _
    // Predicated region
    $region34: #{tpu_custom_call.1} parent=1 // pred_check
      _
    $region35: #{tpu_custom_call.1} parent=1 // pred_check_branch
      %183 = sbr.rel (0) target = $region37
    $region36: #{tpu_custom_call.1} parent=1 // pred_region
      %184 = dma.done [#allocation4], 128
    $region37: #{tpu_custom_call.1} parent=1 // pred_fallthru
      _
    // Predicated region
    $region38: #{tpu_custom_call.1} parent=1 // pred_check
      _
    $region39: #{tpu_custom_call.1} parent=1 // pred_check_branch
      %186 = sbr.rel (0) target = $region41
    $region40: #{tpu_custom_call.1} parent=1 // pred_region
      %187 = dma.done [#allocation9], 128
    $region41: #{tpu_custom_call.1} parent=1 // pred_fallthru
      _
    // Predicated region
    $region42: #{tpu_custom_call.1} parent=1 // pred_check
      _
    $region43: #{tpu_custom_call.1} parent=1 // pred_check_branch
      %189 = sbr.rel (0) target = $region45
    $region44: #{tpu_custom_call.1} parent=1 // pred_region
      %190 = dma.done [#allocation9], 128
    $region45: #{tpu_custom_call.1} parent=1 // pred_fallthru
      _
    %191 = vsyncpa [#allocation3], 1
    %192 = vsyncpa [#allocation6], 1
    %193 = vsyncpa [#allocation4], 1
    %194 = vsyncpa [#allocation9], 1

</llo_original>
